<compile_context>
chip_gen: v5e
topology: v5e:2x2
jax: 0.10.0
libtpu: 0.0.40
codegen_flags: <defaults>
</compile_context>

<pallas_src>
import math
from functools import partial

import numpy as np
import jax
import jax.numpy as jnp
from jax import lax
from jax.experimental import pallas as pl
from jax.experimental.pallas import tpu as pltpu

EPSILON = 1e-5


def _round_up(x, m):
    return (x + m - 1) // m * m


def _feature_kernel(chunks_ref, dft_ref, feats_ref, cplx_ref, *,
                    eps, hop, n_split, im_off):
    # chunks_ref: (1, n_chunks, hop)   compute dtype (bf16 by default)
    # dft_ref:    (frame_len, C)       window-folded fused DFT basis
    # feats_ref:  (1, T, Cf) f32       normalized log-mag (lanes [0:F] valid)
    # cplx_ref:   (1, T, C) f32        re in lanes [0:F], im in [im_off:im_off+F]
    T = cplx_ref.shape[1]
    Cf = feats_ref.shape[2]

    x = chunks_ref[0]                                  # (n_chunks, hop)

    # Fused real DFT: frame t = chunks t .. t+n_split-1, so
    #   y[t] = sum_i chunk_{t+i} @ D_i  with D_i = basis rows [i*hop:(i+1)*hop].
    # Each term is one lane-dense bf16 MXU matmul with f32 accumulation; the
    # per-term shift is a cheap f32 sublane slice of the matmul result
    # (i=0 needs no shift at all).
    y = None
    for i in range(n_split):
        z = jnp.dot(x, dft_ref[i * hop:(i + 1) * hop, :],
                    preferred_element_type=jnp.float32)   # (n_chunks, C)
        z = z[i:i + T, :]                                  # (T, C)
        y = z if y is None else y + z

    # (re | im) spectrum slab -- one lane-dense store; wrapper slices/transposes.
    cplx_ref[0] = y

    # AbsTransform: mag^2 = re^2 + im^2, built on the full 128-lane slab via an
    # XLU lane roll (lanes [0:F] hold the real bins, padding lanes stay 0), then
    # narrowed to the Cf-lane feats slab at a 128-lane boundary.
    y2 = y * y
    mag2 = (y2 + pltpu.roll(y2, shift=im_off, axis=1))[:, :Cf]   # (T, Cf)
    mag = jnp.sqrt(mag2)

    # LogTransform: clamp + log.
    logm = jnp.log(jnp.maximum(mag, eps))

    # CmvnTransform: utterance-level mean/var over time (all T frames, exactly
    # as the PyTorch module does -- it does not mask padded frames).
    m = jnp.mean(logm, axis=0, keepdims=True)             # (1, Cf)
    ms = jnp.mean(logm * logm, axis=0, keepdims=True)     # (1, Cf)
    var = jnp.maximum(ms - m * m, 0.0)                    # guard cancellation
    feats_ref[0] = (logm - m) * lax.rsqrt(var + eps)      # rsqrt rides the EUP


def feature_transform(wav_pad, wav_len, *, frame_len=64, frame_hop=32,
                      eps=EPSILON, compute_dtype=jnp.bfloat16):
    """
    Args:
      wav_pad: (N, S) float32 waveform (already padded)
      wav_len: (N,) int32 number of valid samples, or None
    Returns:
      feats:   (N, T, F) normalized log-magnitude features (float32)
      cplx_re: (N, F, T) real part of STFT (PyTorch N x F x T convention)
      cplx_im: (N, F, T) imag part of STFT
      feats_len: (N,) int32 or None
    """
    wav_pad = jnp.asarray(wav_pad, jnp.float32)
    N, S = wav_pad.shape

    # round_pow_of_two
    n_fft = 1 << int(math.ceil(math.log2(frame_len)))
    F = n_fft // 2 + 1
    # center=False framing
    T = (S - frame_len) // frame_hop + 1

    # Lane layout of the fused DFT output: re in [0:F], im in [im_off:im_off+F],
    # total lane count C a multiple of 128 (lane-dense MXU output + stores).
    # The feats slab only needs the real bins -> Cf = round_up(F, 128) <= C.
    C = _round_up(2 * F, 128)
    Cf = _round_up(F, 128)
    im_off = C // 2

    # --- waveform chunking (no 2x frames gather in HBM) -----------------------
    if frame_len % frame_hop == 0:
        n_split = frame_len // frame_hop           # frame = n_split hop-chunks
        hop = frame_hop
        n_chunks = T + n_split - 1
        chunks = wav_pad[:, :n_chunks * hop].reshape(N, n_chunks, hop)
    else:
        # Fallback: host framing gather when frame_hop does not divide frame_len.
        n_split, hop, n_chunks = 1, frame_len, T
        idx = jnp.arange(T)[:, None] * frame_hop + jnp.arange(frame_len)[None, :]
        chunks = wav_pad[:, idx]
    chunks = chunks.astype(compute_dtype)

    # --- fused, window-folded real-DFT basis (host constant) ------------------
    n = np.arange(frame_len)
    win = np.sqrt(0.5 * (1.0 - np.cos(2.0 * np.pi * n / frame_len)))  # sqrthann
    k = np.arange(F)
    ang = 2.0 * np.pi * np.outer(n, k) / n_fft                        # (L, F)
    dft_cat = np.zeros((frame_len, C), np.float32)
    dft_cat[:, :F] = win[:, None] * np.cos(ang)
    dft_cat[:, im_off:im_off + F] = win[:, None] * (-np.sin(ang))
    dft_cat = jnp.asarray(dft_cat, compute_dtype)

    kernel = partial(_feature_kernel, eps=float(eps), hop=hop,
                     n_split=n_split, im_off=im_off)

    # VMEM per grid step: chunks (~S*2B) + basis (frame_len*C*2B) + one (T, Cf)
    # and one (T, C) f32 output slab (double-buffered) -- a few MB even for
    # multi-minute utterances, comfortably inside the 32 MiB scoped default.
    # TODO(synk): for extremely long T (or N==1 on v7x's two TensorCores), add a
    # T-tiled grid axis with a two-pass CMVN instead of whole-T blocks.
    out_shapes = (
        jax.ShapeDtypeStruct((N, T, Cf), jnp.float32),  # feats slab (lane-padded)
        jax.ShapeDtypeStruct((N, T, C), jnp.float32),   # (re | im) slab
    )
    feats_slab, cplx_slab = pl.pallas_call(
        kernel,
        out_shape=out_shapes,
        grid_spec=pltpu.PrefetchScalarGridSpec(
            num_scalar_prefetch=0,
            grid=(N,),
            in_specs=[
                pl.BlockSpec((1, n_chunks, hop), lambda b: (b, 0, 0)),
                pl.BlockSpec((frame_len, C), lambda b: (0, 0)),  # grid-invariant
            ],
            out_specs=[
                pl.BlockSpec((1, T, Cf), lambda b: (b, 0, 0)),
                pl.BlockSpec((1, T, C), lambda b: (b, 0, 0)),
            ],
        ),
        compiler_params=pltpu.CompilerParams(
            dimension_semantics=("parallel",)),
    )(chunks, dft_cat)

    feats = feats_slab[:, :, :F]
    # PyTorch STFT / ComplexTensor convention is N x F x T.
    cplx_re = jnp.transpose(cplx_slab[:, :, :F], (0, 2, 1))
    cplx_im = jnp.transpose(cplx_slab[:, :, im_off:im_off + F], (0, 2, 1))

    feats_len = None
    if wav_len is not None:
        feats_len = (wav_len - frame_len) // frame_hop + 1
    return feats, cplx_re, cplx_im, feats_len


def _reference(wav_pad, frame_len, frame_hop, eps=EPSILON,
               compute_dtype=jnp.bfloat16):
    """Pure-JAX reference using the same MXU precision policy
    (bf16 operands, f32 accumulation) for validation."""
    N, S = wav_pad.shape
    n_fft = 1 << int(math.ceil(math.log2(frame_len)))
    F = n_fft // 2 + 1
    T = (S - frame_len) // frame_hop + 1
    idx = jnp.arange(T)[:, None] * frame_hop + jnp.arange(frame_len)[None, :]
    frames = wav_pad[:, idx].astype(compute_dtype)                # (N, T, L)
    n = np.arange(frame_len)
    win = np.sqrt(0.5 * (1.0 - np.cos(2.0 * np.pi * n / frame_len)))
    k = np.arange(F)
    ang = 2.0 * np.pi * np.outer(n, k) / n_fft
    cos_b = jnp.asarray(win[:, None] * np.cos(ang),
                        jnp.float32).astype(compute_dtype)
    sin_b = jnp.asarray(win[:, None] * -np.sin(ang),
                        jnp.float32).astype(compute_dtype)
    re = jnp.einsum("ntl,lf->ntf", frames, cos_b,
                    preferred_element_type=jnp.float32)
    im = jnp.einsum("ntl,lf->ntf", frames, sin_b,
                    preferred_element_type=jnp.float32)
    mag = jnp.sqrt(re * re + im * im)
    logm = jnp.log(jnp.maximum(mag, eps))
    m = jnp.mean(logm, axis=1, keepdims=True)
    ms = jnp.mean(logm * logm, axis=1, keepdims=True)
    s = jnp.sqrt(jnp.maximum(ms - m * m, 0.0) + eps)
    return (logm - m) / s, re, im


def _check(key, N, S, frame_len, frame_hop):
    wav = jax.random.normal(key, (N, S), dtype=jnp.float32)
    wav_len = jnp.array([S, S - frame_hop], dtype=jnp.int32)

    feats, cplx_re, cplx_im, feats_len = feature_transform(
        wav, wav_len, frame_len=frame_len, frame_hop=frame_hop)
    jax.block_until_ready((feats, cplx_re, cplx_im, feats_len))

    ref_feats, ref_re, ref_im = _reference(wav, frame_len, frame_hop)
    np.testing.assert_allclose(np.asarray(feats), np.asarray(ref_feats),
                               rtol=1e-2, atol=1e-2)
    np.testing.assert_allclose(np.asarray(cplx_re),
                               np.asarray(jnp.transpose(ref_re, (0, 2, 1))),
                               rtol=1e-2, atol=1e-2)
    np.testing.assert_allclose(np.asarray(cplx_im),
                               np.asarray(jnp.transpose(ref_im, (0, 2, 1))),
                               rtol=1e-2, atol=1e-2)
    expected_len = (np.asarray(wav_len) - frame_len) // frame_hop + 1
    assert np.array_equal(np.asarray(feats_len), expected_len)


if __name__ == "__main__":
    key = jax.random.PRNGKey(0)
    k0, k1 = jax.random.split(key)

    # Config A: Cf == C (feats slab equals full slab width).
    _check(k0, N=2, S=512, frame_len=64, frame_hop=32)
    # Config B: Cf < C (exercises the narrowed feats slab) and odd T (=15).
    _check(k1, N=2, S=1024, frame_len=128, frame_hop=64)

    print("KERNEL_OK")
</pallas_src>

<mosaic_0001>
module attributes {stable_mosaic.version = 11 : i64} {
  func.func @_feature_kernel(%arg0: i32, %arg1: memref<1x16x32xbf16, #tpu.memory_space<vmem>>, %arg2: memref<64x128xbf16, #tpu.memory_space<vmem>>, %arg3: memref<1x15x128xf32, #tpu.memory_space<vmem>>, %arg4: memref<1x15x128xf32, #tpu.memory_space<vmem>>) attributes {dimension_semantics = [#tpu.dimension_semantics<parallel>], iteration_bounds = array<i64: 2>, scalar_prefetch = 0 : i64, scratch_operands = 0 : i64, tpu.core_type = #tpu.core_type<tc>, window_params = [{transform_indices = @transform_0, window_bounds = array<i64: 1, 16, 32>}, {pipeline_mode = #tpu.pipeline_mode<synchronous>, transform_indices = @transform_1, window_bounds = array<i64: 64, 128>}, {transform_indices = @transform_2, window_bounds = array<i64: 1, 15, 128>}, {transform_indices = @transform_3, window_bounds = array<i64: 1, 15, 128>}]} {
    %c0 = arith.constant 0 : index
    %c0_0 = arith.constant 0 : index
    %c0_1 = arith.constant 0 : index
    %0 = vector.load %arg1[%c0, %c0_0, %c0_1] : memref<1x16x32xbf16, #tpu.memory_space<vmem>>, vector<1x16x32xbf16>
    %1 = vector.shape_cast %0 : vector<1x16x32xbf16> to vector<16x32xbf16>
    %c0_2 = arith.constant 0 : index
    %c0_3 = arith.constant 0 : index
    %2 = vector.load %arg2[%c0_2, %c0_3] : memref<64x128xbf16, #tpu.memory_space<vmem>>, vector<32x128xbf16>
    %cst = arith.constant dense<0.000000e+00> : vector<16x128xf32>
    %3 = tpu.matmul %1, %2, %cst {dimension_numbers = #tpu.dot_dimension_numbers<[1], [0], [0], [1], [0, 0, 1, 1], [], []>} : vector<16x32xbf16>, vector<32x128xbf16>, vector<16x128xf32> -> vector<16x128xf32>
    %4 = vector.extract_strided_slice %3 {offsets = [0, 0], sizes = [15, 128], strides = [1, 1]} : vector<16x128xf32> to vector<15x128xf32>
    %c32 = arith.constant 32 : index
    %c0_4 = arith.constant 0 : index
    %5 = vector.load %arg2[%c32, %c0_4] : memref<64x128xbf16, #tpu.memory_space<vmem>>, vector<32x128xbf16>
    %cst_5 = arith.constant dense<0.000000e+00> : vector<16x128xf32>
    %6 = tpu.matmul %1, %5, %cst_5 {dimension_numbers = #tpu.dot_dimension_numbers<[1], [0], [0], [1], [0, 0, 1, 1], [], []>} : vector<16x32xbf16>, vector<32x128xbf16>, vector<16x128xf32> -> vector<16x128xf32>
    %7 = vector.extract_strided_slice %6 {offsets = [1, 0], sizes = [15, 128], strides = [1, 1]} : vector<16x128xf32> to vector<15x128xf32>
    %8 = arith.addf %4, %7 : vector<15x128xf32>
    %c0_6 = arith.constant 0 : index
    %c0_7 = arith.constant 0 : index
    %c0_8 = arith.constant 0 : index
    %9 = vector.load %arg4[%c0_6, %c0_7, %c0_8] : memref<1x15x128xf32, #tpu.memory_space<vmem>>, vector<1x15x128xf32>
    %10 = vector.shape_cast %9 : vector<1x15x128xf32> to vector<15x128xf32>
    %11 = vector.shape_cast %8 : vector<15x128xf32> to vector<1x15x128xf32>
    tpu.vector_store %arg4[%c0_6, %c0_7, %c0_8], %11 {strides = array<i32>} : memref<1x15x128xf32, #tpu.memory_space<vmem>>, vector<1x15x128xf32>,
    %12 = arith.mulf %8, %8 : vector<15x128xf32>
    %c64_i32 = arith.constant 64 : i32
    %13 = tpu.dynamic_rotate %12 by %c64_i32 dim 1 : vector<15x128xf32>, i32 -> vector<15x128xf32>
    %14 = arith.addf %12, %13 : vector<15x128xf32>
    %15 = math.sqrt %14 : vector<15x128xf32>
    %cst_9 = arith.constant 9.99999974E-6 : f32
    %16 = vector.broadcast %cst_9 : f32 to vector<15x128xf32>
    %17 = arith.maximumf %15, %16 : vector<15x128xf32>
    %18 = math.log %17 : vector<15x128xf32>
    %cst_10 = arith.constant dense<0.000000e+00> : vector<128xf32>
    %19 = vector.multi_reduction <add>, %18, %cst_10 [0] : vector<15x128xf32> to vector<128xf32>
    %20 = vector.shape_cast %19 : vector<128xf32> to vector<1x128xf32>
    %cst_11 = arith.constant 1.500000e+01 : f32
    %21 = vector.broadcast %cst_11 : f32 to vector<1x128xf32>
    %22 = arith.divf %20, %21 : vector<1x128xf32>
    %23 = arith.mulf %18, %18 : vector<15x128xf32>
    %cst_12 = arith.constant dense<0.000000e+00> : vector<128xf32>
    %24 = vector.multi_reduction <add>, %23, %cst_12 [0] : vector<15x128xf32> to vector<128xf32>
    %25 = vector.shape_cast %24 : vector<128xf32> to vector<1x128xf32>
    %cst_13 = arith.constant 1.500000e+01 : f32
    %26 = vector.broadcast %cst_13 : f32 to vector<1x128xf32>
    %27 = arith.divf %25, %26 : vector<1x128xf32>
    %28 = arith.mulf %22, %22 : vector<1x128xf32>
    %29 = arith.subf %27, %28 : vector<1x128xf32>
    %cst_14 = arith.constant 0.000000e+00 : f32
    %30 = vector.broadcast %cst_14 : f32 to vector<1x128xf32>
    %31 = arith.maximumf %29, %30 : vector<1x128xf32>
    %32 = vector.broadcast %22 : vector<1x128xf32> to vector<15x128xf32>
    %33 = arith.subf %18, %32 : vector<15x128xf32>
    %cst_15 = arith.constant 9.99999974E-6 : f32
    %34 = vector.broadcast %cst_15 : f32 to vector<1x128xf32>
    %35 = arith.addf %31, %34 : vector<1x128xf32>
    %36 = math.rsqrt %35 : vector<1x128xf32>
    %37 = vector.broadcast %36 : vector<1x128xf32> to vector<15x128xf32>
    %38 = arith.mulf %33, %37 : vector<15x128xf32>
    %c0_16 = arith.constant 0 : index
    %c0_17 = arith.constant 0 : index
    %c0_18 = arith.constant 0 : index
    %39 = vector.load %arg3[%c0_16, %c0_17, %c0_18] : memref<1x15x128xf32, #tpu.memory_space<vmem>>, vector<1x15x128xf32>
    %40 = vector.shape_cast %39 : vector<1x15x128xf32> to vector<15x128xf32>
    %41 = vector.shape_cast %38 : vector<15x128xf32> to vector<1x15x128xf32>
    tpu.vector_store %arg3[%c0_16, %c0_17, %c0_18], %41 {strides = array<i32>} : memref<1x15x128xf32, #tpu.memory_space<vmem>>, vector<1x15x128xf32>,
    return
  }
  func.func @transform_0(%arg0: i32) -> (i32, i32, i32) {
    %c0_i32 = arith.constant 0 : i32
    %c0_i32_0 = arith.constant 0 : i32
    %c0_i32_1 = arith.constant 0 : i32
    return %arg0, %c0_i32, %c0_i32_0 : i32, i32, i32
  }
  func.func @transform_1(%arg0: i32) -> (i32, i32) {
    %c0_i32 = arith.constant 0 : i32
    %c0_i32_0 = arith.constant 0 : i32
    %c0_i32_1 = arith.constant 0 : i32
    return %c0_i32, %c0_i32_0 : i32, i32
  }
  func.func @transform_2(%arg0: i32) -> (i32, i32, i32) {
    %c0_i32 = arith.constant 0 : i32
    %c0_i32_0 = arith.constant 0 : i32
    %c0_i32_1 = arith.constant 0 : i32
    return %arg0, %c0_i32, %c0_i32_0 : i32, i32, i32
  }
  func.func @transform_3(%arg0: i32) -> (i32, i32, i32) {
    %c0_i32 = arith.constant 0 : i32
    %c0_i32_0 = arith.constant 0 : i32
    %c0_i32_1 = arith.constant 0 : i32
    return %arg0, %c0_i32, %c0_i32_0 : i32, i32, i32
  }
}

</mosaic_0001>

<llo_original>
// kernel: tpu_custom_call.1
$region0: #{tpu_custom_call.1}
  #allocation0 [shape = 'u32[]', space=smem, size = 0x4, offset = 0x4, fixed_abs, tag = 'smem constant byte address 0x4 - core index']
  #allocation1 [shape = 'u32[72,128]{1,0:T(1,128)}', space=vmem, size = 0x9000, scoped, tag = 'internal scratch']
  %s0 = inlined_call_operand.hbm [shape: bf16[2,16,32], index: 0, kind: input, shape index: {}]
  %s1 = inlined_call_operand.hbm [shape: bf16[64,128], index: 1, kind: input, shape index: {}]
  %s2 = inlined_call_operand.vmem [shape: f32[2,15,128], index: 2, kind: output, shape index: {0}]
  %s3 = inlined_call_operand.vmem [shape: f32[2,15,128], index: 3, kind: output, shape index: {1}]
  %4 = xla_tuple %s2, %s3
  %s5 = sld [smem:[#allocation0]]
  $region57: #{tpu_custom_call.1} parent=0
    _
  %s7 = ssub.s32 1, %s5
  %s8 = scalar_select 0, %s7, %s5
  $region1: #{tpu_custom_call.1} parent=0
    #allocation2 [shape = 'u8[8192]{0}', space=vmem, size = 0x2000, scoped, tag = 'input window, operand 0']
    #allocation3 [shape = 's32[2]{0}', space=sflag, size = 0x8, scoped, tag = 'scoped memory for tpu_custom_call.1']
    #allocation4 [shape = 'u8[16384]{0}', space=vmem, size = 0x4000, scoped, tag = 'input window, operand 1, single buffered']
    #allocation5 [shape = 's32[1]{0}', space=sflag, size = 0x4, scoped, tag = 'scoped memory for tpu_custom_call.1']
    %9 = vsyncpa [#allocation3], 0
    %s10 = scalar_lea.sflag [#allocation3], 1
    %11 = vsyncpa %s10, 0
    %12 = vsyncpa [#allocation5], 0
    loop: start=0, step=1, limit=4
    $region2: #{tpu_custom_call.1} parent=1 // loop_pre_header
      _
    $region3: #{tpu_custom_call.1} parent=1 // loop_header
      %s14 = sphi 0, %s18
      %p15 = scmp.ge.s32.totalorder %s14, 4
      %s24 = sphi 0, %s26
      %s27 = sphi 0, %s24
      %s28 = sphi 0, %s27
      %s44 = sphi 0, %s28
      %s48 = sphi 0, %s48
      %s50 = sphi 0, %s48
      %s51 = sphi 0, %s50
      %s65 = sphi 0, %s51
      %s71 = sphi 0, %s73
      %s74 = sphi 0, %s71
      %s75 = sphi 0, %s74
      %s91 = sphi 0, %s75
      %s97 = sphi 0, %s99
      %s100 = sphi 0, %s97
      %s101 = sphi 0, %s100
      %s117 = sphi 0, %s101
    $region4: #{tpu_custom_call.1} parent=1 // loop_header_branch
      %17 = sbr.rel (%p15) target = $region8
    $region5: #{tpu_custom_call.1} parent=1 // loop_body
      %s19 = ssub.s32 %s14, 1
      %s20 = ssub.s32 %s14, 2
      %s21 = sadd.s32 %s14, 1
      %s22 = ssub.s32 %s14, %s21
      %p23 = scmp.eq.s32.totalorder %s22, 0
      %s25 = sadd.s32 %s24, 1
      %s26 = scalar_select %p23, %s24, %s25
      %p29 = pneg %p23
      %p30 = scmp.eq.s32.totalorder %s14, 1
      %p31 = por %p29, %p30
      %p32 = scmp.ne.s32.totalorder %s24, %s27
      %p33 = scmp.eq.s32.totalorder %s14, 0
      %p34 = por %p32, %p33
      %p35 = scmp.ne.s32.totalorder %s24, %s27
      %p36 = scmp.eq.s32.totalorder %s19, 1
      %p37 = por %p35, %p36
      %p38 = scmp.ne.s32.totalorder %s27, %s28
      %p39 = scmp.eq.s32.totalorder %s19, 0
      %p40 = por %p38, %p39
      %p41 = scmp.ne.s32.totalorder %s27, %s28
      %p42 = scmp.eq.s32.totalorder %s20, 1
      %p43 = por %p41, %p42
      %p45 = scmp.ne.s32.totalorder %s28, %s44
      %p46 = scmp.eq.s32.totalorder %s20, 0
      %p47 = por %p45, %p46
      %s49 = sadd.s32 %s48, 1
      %p52 = scmp.eq.s32.totalorder %s14, 1
      %p53 = scmp.ne.s32.totalorder %s48, %s50
      %p54 = scmp.eq.s32.totalorder %s14, 0
      %p55 = por %p53, %p54
      %p56 = scmp.ne.s32.totalorder %s48, %s50
      %p57 = scmp.eq.s32.totalorder %s19, 1
      %p58 = por %p56, %p57
      %p59 = scmp.ne.s32.totalorder %s50, %s51
      %p60 = scmp.eq.s32.totalorder %s19, 0
      %p61 = por %p59, %p60
      %p62 = scmp.ne.s32.totalorder %s50, %s51
      %p63 = scmp.eq.s32.totalorder %s20, 1
      %p64 = por %p62, %p63
      %p66 = scmp.ne.s32.totalorder %s51, %s65
      %p67 = scmp.eq.s32.totalorder %s20, 0
      %p68 = por %p66, %p67
      %s69 = ssub.s32 %s14, %s21
      %p70 = scmp.eq.s32.totalorder %s69, 0
      %s72 = sadd.s32 %s71, 1
      %s73 = scalar_select %p70, %s71, %s72
      %p76 = pneg %p70
      %p77 = scmp.eq.s32.totalorder %s14, 1
      %p78 = por %p76, %p77
      %p79 = scmp.ne.s32.totalorder %s71, %s74
      %p80 = scmp.eq.s32.totalorder %s14, 0
      %p81 = por %p79, %p80
      %p82 = scmp.ne.s32.totalorder %s71, %s74
      %p83 = scmp.eq.s32.totalorder %s19, 1
      %p84 = por %p82, %p83
      %p85 = scmp.ne.s32.totalorder %s74, %s75
      %p86 = scmp.eq.s32.totalorder %s19, 0
      %p87 = por %p85, %p86
      %p88 = scmp.ne.s32.totalorder %s74, %s75
      %p89 = scmp.eq.s32.totalorder %s20, 1
      %p90 = por %p88, %p89
      %p92 = scmp.ne.s32.totalorder %s75, %s91
      %p93 = scmp.eq.s32.totalorder %s20, 0
      %p94 = por %p92, %p93
      %s95 = ssub.s32 %s14, %s21
      %p96 = scmp.eq.s32.totalorder %s95, 0
      %s98 = sadd.s32 %s97, 1
      %s99 = scalar_select %p96, %s97, %s98
      %p102 = pneg %p96
      %p103 = scmp.eq.s32.totalorder %s14, 1
      %p104 = por %p102, %p103
      %p105 = scmp.ne.s32.totalorder %s97, %s100
      %p106 = scmp.eq.s32.totalorder %s14, 0
      %p107 = por %p105, %p106
      %p108 = scmp.ne.s32.totalorder %s97, %s100
      %p109 = scmp.eq.s32.totalorder %s19, 1
      %p110 = por %p108, %p109
      %p111 = scmp.ne.s32.totalorder %s100, %s101
      %p112 = scmp.eq.s32.totalorder %s19, 0
      %p113 = por %p111, %p112
      %p114 = scmp.ne.s32.totalorder %s100, %s101
      %p115 = scmp.eq.s32.totalorder %s20, 1
      %p116 = por %p114, %p115
      %p118 = scmp.ne.s32.totalorder %s101, %s117
      %p119 = scmp.eq.s32.totalorder %s20, 0
      %p120 = por %p118, %p119
      %p121 = scmp.le.s32.totalorder 1, %s14
      %p122 = scmp.lt.s32.totalorder %s14, 3
      %p123 = pnand %p121, %p122
      %p124 = pneg %p123
      // Predicated region
      $region9: #{tpu_custom_call.1} parent=5 // pred_check
        _
      $region10: #{tpu_custom_call.1} parent=5 // pred_check_branch
        %126 = sbr.rel (%p123) target = $region12
      $region11: #{tpu_custom_call.1} parent=5 // pred_region
        %s127 = ssub.s32 %s14, 1
        // Predicated region
        $region13: #{tpu_custom_call.1} parent=11 // pred_check
          %p128 = pneg %p61
        $region14: #{tpu_custom_call.1} parent=11 // pred_check_branch
          %130 = sbr.rel (%p128) target = $region16
        $region15: #{tpu_custom_call.1} parent=11 // pred_region
          %132 = vsyncadd [#allocation5], 0
          %s133 = sshll.u32 %s1, 4
          %s134 = int_to_ptr.hbm [resolvable:$true] %s133
          %s135 = sshll.u32 [#allocation4], 4
          %s136 = int_to_ptr.vmem [resolvable:$true] %s135
          %141 = dma.hbm_to_vmem [thread:$0]  %s134, 512, %s136, [#allocation5], 64, 64, 4
        $region16: #{tpu_custom_call.1} parent=11 // pred_fallthru
          _
      $region12: #{tpu_custom_call.1} parent=5 // pred_fallthru
        _
      %p142 = scmp.lt.s32.totalorder %s14, 2
      // Predicated region
      $region17: #{tpu_custom_call.1} parent=5 // pred_check
        %p143 = pneg %p142
      $region18: #{tpu_custom_call.1} parent=5 // pred_check_branch
        %145 = sbr.rel (%p143) target = $region20
      $region19: #{tpu_custom_call.1} parent=5 // pred_region
        // Predicated region
        $region21: #{tpu_custom_call.1} parent=19 // pred_check
          %p146 = pneg %p34
        $region22: #{tpu_custom_call.1} parent=19 // pred_check_branch
          %148 = sbr.rel (%p146) target = $region24
        $region23: #{tpu_custom_call.1} parent=19 // pred_region
          %s149 = sand.u32 %s24, 1
          %s150 = scalar_lea.sflag [#allocation3], %s149
          %s151 = sand.u32 %s24, 1
          %s152 = smul.addr %s151, 8
          %s153 = scalar_lea.vmem [#allocation2], %s152
          %155 = vsyncadd %s150, 0
          %s156 = smul.addr %s14, 2
          %s157 = smul.addr %s156, 4
          %s158 = scalar_lea.hbm %s0, %s157
          %s159 = sshll.u32 %s158, 4
          %s160 = int_to_ptr.hbm [resolvable:$true] %s159
          %s161 = sshll.u32 %s153, 4
          %s162 = int_to_ptr.vmem [resolvable:$true] %s161
          %167 = dma.hbm_to_vmem [thread:$0]  %s160, 128, %s162, %s150, 64, 64, 4
        $region24: #{tpu_custom_call.1} parent=19 // pred_fallthru
          _
      $region20: #{tpu_custom_call.1} parent=5 // pred_fallthru
        _
      %p168 = scmp.le.s32.totalorder 1, %s14
      %p169 = scmp.lt.s32.totalorder %s14, 3
      %p170 = pnand %p168, %p169
      %p171 = pneg %p170
      // Predicated region
      $region25: #{tpu_custom_call.1} parent=5 // pred_check
        _
      $region26: #{tpu_custom_call.1} parent=5 // pred_check_branch
        %173 = sbr.rel (%p170) target = $region28
      $region27: #{tpu_custom_call.1} parent=5 // pred_region
        %s174 = ssub.s32 %s14, 1
        %s175 = sand.u32 %s27, 1
        %s176 = scalar_lea.sflag [#allocation3], %s175
        %s177 = sand.u32 %s27, 1
        %s178 = smul.addr %s177, 8
        %s179 = scalar_lea.vmem [#allocation2], %s178
        // Predicated region
        $region29: #{tpu_custom_call.1} parent=27 // pred_check
          %p180 = pneg %p40
        $region30: #{tpu_custom_call.1} parent=27 // pred_check_branch
          %182 = sbr.rel (%p180) target = $region32
        $region31: #{tpu_custom_call.1} parent=27 // pred_region
          %184 = dma.done %s176, 128
        $region32: #{tpu_custom_call.1} parent=27 // pred_fallthru
          _
        // Predicated region
        $region33: #{tpu_custom_call.1} parent=27 // pred_check
          %p185 = pneg %p61
        $region34: #{tpu_custom_call.1} parent=27 // pred_check_branch
          %187 = sbr.rel (%p185) target = $region36
        $region35: #{tpu_custom_call.1} parent=27 // pred_region
          %189 = dma.done [#allocation5], 512
        $region36: #{tpu_custom_call.1} parent=27 // pred_fallthru
          _
        %s190 = sand.u32 %s27, 1
        %s191 = scalar_lea.sflag [#allocation3], %s190
        %s192 = sand.u32 %s27, 1
        %s193 = smul.addr %s192, 8
        %s194 = scalar_lea.vmem [#allocation2], %s193
        %p195 = pneg %p40
        %p196 = pneg %p37
        %p197 = pneg %p61
        %p198 = pneg %p58
        %p199 = pneg %p87
        %p200 = pneg %p84
        %p201 = scmp.lt.s32.totalorder %s19, 1
        %s202 = scalar_select %p201, %s19, 1
        %s203 = smul.addr %s202, 2
        %s204 = smul.addr %s203, 8
        %s205 = scalar_lea.vmem %s2, %s204
        %p206 = pneg %p113
        %p207 = pneg %p110
        %p208 = scmp.lt.s32.totalorder %s19, 1
        %s209 = scalar_select %p208, %s19, 1
        %s210 = smul.addr %s209, 2
        %s211 = smul.addr %s210, 8
        %s212 = scalar_lea.vmem %s3, %s211
        %p213 = scmp.lt.s32.totalorder %s19, 1
        %s214 = scalar_select %p213, %s19, 1
        %s215 = smul.addr %s214, 2
        %s216 = smul.addr %s215, 8
        %s217 = scalar_lea.vmem %s2, %s216
        %p218 = scmp.lt.s32.totalorder %s19, 1
        %s219 = scalar_select %p218, %s19, 1
        %s220 = smul.addr %s219, 2
        %s221 = smul.addr %s220, 8
        %s222 = scalar_lea.vmem %s3, %s221
        %v224 = vld [vmem:[%s179] sm:$0xf]
        %v225 = vld [vmem:[%s179 + $0x4] sm:$0xf]
        %v226 = vld [vmem:[#allocation4] sm:$0xf]
        %v227 = vld [vmem:[#allocation4 + $0x4] sm:$0xf]
        %v228 = vld [vmem:[#allocation4 + $0x8] sm:$0xf]
        %v229 = vld [vmem:[#allocation4 + $0xc] sm:$0xf]
        %v232 = vunpack.c.l.b16 %v224
        %v233 = vunpack.c.l.b16 %v225
        %v234 = vpack.c.b16 %v233, %v232
        %v239 = vunpack.c.l.b16 %v226
        %v240 = vunpack.c.l.b16 %v227
        %v241 = vunpack.c.l.b16 %v228
        %v242 = vunpack.c.l.b16 %v229
        %v243 = vpack.c.b16 %v240, %v239
        %v244 = vpack.c.b16 %v242, %v241
        %vm247 = vcmask 261120
        %v249 = vsel %vm247, %v234, 0
        %251 = vmatpush.bf16.msra.mxu0 0
        %252 = vmatpush.bf16.msra.mxu0 0
        %253 = vmatpush.bf16.msra.mxu0 0
        %254 = vmatpush.bf16.msra.mxu0 0
        %255 = vmatpush.bf16.msra.mxu0 0
        %256 = vmatpush.bf16.msra.mxu0 0
        %257 = vmatpush.bf16.msra.mxu0 %v244
        %258 = vmatpush.bf16.msra.mxu0 %v243
        %259 = vmatmul.bf16.gmra.mxu0 %v249
        %v260 = vpop.f32.mrf.mxu0
        %v261 = vadd.f32 0.0, %v260
        %v262 = vpop.f32.mrf.mxu0
        %v263 = vadd.f32 0.0, %v262
        %264 = vdwg.mxu0
        %v265 = vld [vmem:[#allocation4 + $0x10] sm:$0xf]
        %v266 = vld [vmem:[#allocation4 + $0x14] sm:$0xf]
        %v267 = vld [vmem:[#allocation4 + $0x18] sm:$0xf]
        %v268 = vld [vmem:[#allocation4 + $0x1c] sm:$0xf]
        %v273 = vunpack.c.l.b16 %v265
        %v274 = vunpack.c.l.b16 %v266
        %v275 = vunpack.c.l.b16 %v267
        %v276 = vunpack.c.l.b16 %v268
        %v277 = vpack.c.b16 %v274, %v273
        %v278 = vpack.c.b16 %v276, %v275
        %281 = vmatpush.bf16.msra.mxu0 0
        %282 = vmatpush.bf16.msra.mxu0 0
        %283 = vmatpush.bf16.msra.mxu0 0
        %284 = vmatpush.bf16.msra.mxu0 0
        %285 = vmatpush.bf16.msra.mxu0 0
        %286 = vmatpush.bf16.msra.mxu0 0
        %287 = vmatpush.bf16.msra.mxu0 %v278
        %288 = vmatpush.bf16.msra.mxu0 %v277
        %289 = vmatmul.bf16.gmra.mxu0 %v249
        %v290 = vpop.f32.mrf.mxu0
        %v291 = vadd.f32 0.0, %v290
        %v292 = vpop.f32.mrf.mxu0
        %v293 = vadd.f32 0.0, %v292
        %294 = vdwg.mxu0
        %vm297 = vcmask 1046528
        %v298 = vrot.slane %v291, 1
        %v299 = vrot.slane %v293, 1
        %v300 = vsel %vm297, %v298, %v299
        %v303 = vadd.f32 %v261, %v300
        %v304 = vadd.f32 %v263, %v299
        %305 = vst [vmem:[%s222] sm:$0xff] %v303
        %306 = vst [vmem:[%s222 + $0x8] sm:$0x7f] %v304
        %v307 = vmul.f32 %v303, %v303
        %v308 = vmul.f32 %v304, %v304
        %309 = vrot.lane.b32.xlu0 %v307, 64
        %v310 = vpop.permute.xlu0 %309
        %311 = vrot.lane.b32.xlu0 %v308, 64
        %v312 = vpop.permute.xlu0 %311
        %v313 = vadd.f32 %v307, %v310
        %v314 = vadd.f32 %v308, %v312
        %v315 = vrsqrt.pop %v313
        %v316 = vmul.f32 %v315, %v313
        %v317 = vmul.f32 %v316, %v315
        %v318 = vmul.f32 0.5, %v317
        %v319 = vsub.f32 1.5, %v318
        %v320 = vmul.f32 %v315, %v319
        %v321 = vmul.f32 %v313, %v320
        %vm322 = vcmp.eq.f32.partialorder %v313, inf
        %v323 = vsel %vm322, %v313, %v321
        %vm324 = vcmp.eq.f32.partialorder %v313, 0.0
        %v325 = vand.u32 %v313, 2147483648
        %v326 = vsel %vm324, %v325, %v323
        %v327 = vrsqrt.pop %v314
        %v328 = vmul.f32 %v327, %v314
        %v329 = vmul.f32 %v328, %v327
        %v330 = vmul.f32 0.5, %v329
        %v331 = vsub.f32 1.5, %v330
        %v332 = vmul.f32 %v327, %v331
        %v333 = vmul.f32 %v314, %v332
        %vm334 = vcmp.eq.f32.partialorder %v314, inf
        %v335 = vsel %vm334, %v314, %v333
        %vm336 = vcmp.eq.f32.partialorder %v314, 0.0
        %v337 = vand.u32 %v314, 2147483648
        %v338 = vsel %vm336, %v337, %v335
        %v339 = vmax.f32 %v326, 1e-05
        %v340 = vmax.f32 %v338, 1e-05
        %v341 = vlog2.pop %v339
        %v342 = vmul.f32 %v341, 0.6931472
        %v343 = vlog2.pop %v340
        %v344 = vmul.f32 %v343, 0.6931472
        %v345 = vsel %vm297, %v344, 0.0
        %v346 = vadd.f32 %v342, %v345
        %v347 = vrot.slane %v346, 4
        %v348 = vadd.f32 %v346, %v347
        %v349 = vrot.slane %v348, 2
        %v350 = vadd.f32 %v348, %v349
        %v351 = vrot.slane %v350, 1
        %v352 = vadd.f32 %v350, %v351
        %v353 = vrcp.pop 15.0
        %v354 = vmul.f32 15.0, %v353
        %v355 = vsub.f32 1.0, %v354
        %v356 = vmul.f32 %v353, %v355
        %v357 = vadd.f32 %v353, %v356
        %vm358 = vweird.f32 %v353
        %v359 = vsel %vm358, %v353, %v357
        %v360 = vmul.f32 %v352, %v359
        %v361 = vmul.f32 %v342, %v342
        %v362 = vmul.f32 %v344, %v344
        %v363 = vsel %vm297, %v362, 0.0
        %v364 = vadd.f32 %v361, %v363
        %v365 = vrot.slane %v364, 4
        %v366 = vadd.f32 %v364, %v365
        %v367 = vrot.slane %v366, 2
        %v368 = vadd.f32 %v366, %v367
        %v369 = vrot.slane %v368, 1
        %v370 = vadd.f32 %v368, %v369
        %v371 = vmul.f32 %v370, %v359
        %v372 = vmul.f32 %v360, %v360
        %v373 = vsub.f32 %v371, %v372
        %v374 = vmax.f32 %v373, 0.0
        %v375 = vsub.f32 %v342, %v360
        %v376 = vsub.f32 %v344, %v360
        %v377 = vadd.f32 %v374, 1e-05
        %v378 = vrsqrt.pop %v377
        %v379 = vmul.f32 %v378, %v377
        %v380 = vmul.f32 %v379, %v378
        %v381 = vmul.f32 0.5, %v380
        %v382 = vsub.f32 1.5, %v381
        %v383 = vmul.f32 %v378, %v382
        %vm384 = vweird.f32 %v377
        %vm385 = vweird.f32 %v378
        %vm386 = vmor %vm384, %vm385
        %v387 = vsel %vm386, %v378, %v383
        %v388 = vmul.f32 %v375, %v387
        %v389 = vmul.f32 %v376, %v387
        %390 = vst [vmem:[%s217] sm:$0xff] %v388
        %391 = vst [vmem:[%s217 + $0x8] sm:$0x7f] %v389
        %p392 = scmp.lt.s32.totalorder %s19, 1
        %s393 = scalar_select %p392, %s19, 1
        %s394 = smul.addr %s393, 2
        %s395 = smul.addr %s394, 8
        %s396 = scalar_lea.vmem %s2, %s395
        %p397 = scmp.lt.s32.totalorder %s19, 1
        %s398 = scalar_select %p397, %s19, 1
        %s399 = smul.addr %s398, 2
        %s400 = smul.addr %s399, 8
        %s401 = scalar_lea.vmem %s3, %s400
        // Predicated region
        $region37: #{tpu_custom_call.1} parent=27 // pred_check
          %p402 = pneg %p84
        $region38: #{tpu_custom_call.1} parent=27 // pred_check_branch
          %404 = sbr.rel (%p402) target = $region40
        $region39: #{tpu_custom_call.1} parent=27 // pred_region
          _
        $region40: #{tpu_custom_call.1} parent=27 // pred_fallthru
          _
        // Predicated region
        $region41: #{tpu_custom_call.1} parent=27 // pred_check
          %p405 = pneg %p110
        $region42: #{tpu_custom_call.1} parent=27 // pred_check_branch
          %407 = sbr.rel (%p405) target = $region44
        $region43: #{tpu_custom_call.1} parent=27 // pred_region
          _
        $region44: #{tpu_custom_call.1} parent=27 // pred_fallthru
          _
      $region28: #{tpu_custom_call.1} parent=5 // pred_fallthru
        _
      %p408 = scmp.le.s32.totalorder 2, %s14
      // Predicated region
      $region45: #{tpu_custom_call.1} parent=5 // pred_check
        %p409 = pneg %p408
      $region46: #{tpu_custom_call.1} parent=5 // pred_check_branch
        %411 = sbr.rel (%p409) target = $region48
      $region47: #{tpu_custom_call.1} parent=5 // pred_region
        %s412 = ssub.s32 %s14, 2
        // Predicated region
        $region49: #{tpu_custom_call.1} parent=47 // pred_check
          %p413 = pneg %p90
        $region50: #{tpu_custom_call.1} parent=47 // pred_check_branch
          %415 = sbr.rel (%p413) target = $region52
        $region51: #{tpu_custom_call.1} parent=47 // pred_region
          %p416 = scmp.lt.s32.totalorder %s20, 1
          %s417 = scalar_select %p416, %s20, 1
          %s418 = smul.addr %s417, 2
          %s419 = smul.addr %s418, 8
          %s420 = scalar_lea.vmem %s2, %s419
        $region52: #{tpu_custom_call.1} parent=47 // pred_fallthru
          _
        // Predicated region
        $region53: #{tpu_custom_call.1} parent=47 // pred_check
          %p421 = pneg %p116
        $region54: #{tpu_custom_call.1} parent=47 // pred_check_branch
          %423 = sbr.rel (%p421) target = $region56
        $region55: #{tpu_custom_call.1} parent=47 // pred_region
          %p424 = scmp.lt.s32.totalorder %s20, 1
          %s425 = scalar_select %p424, %s20, 1
          %s426 = smul.addr %s425, 2
          %s427 = smul.addr %s426, 8
          %s428 = scalar_lea.vmem %s3, %s427
        $region56: #{tpu_custom_call.1} parent=47 // pred_fallthru
          _
      $region48: #{tpu_custom_call.1} parent=5 // pred_fallthru
        _
    $region6: #{tpu_custom_call.1} parent=1 // loop_footer
      %s18 = sadd.s32 1, %s14
    $region7: #{tpu_custom_call.1} parent=1 // loop_footer_branch
      %13 = sbr.rel target = $region3
    $region8: #{tpu_custom_call.1} parent=1 // loop_exit
      _
    %429 = vsyncpa [#allocation3], 1
    %s430 = scalar_lea.sflag [#allocation3], 1
    %431 = vsyncpa %s430, 1
    %432 = vsyncpa [#allocation5], 1

</llo_original>
